<compile_context>
chip_gen: v5e
topology: v5e:2x2
jax: 0.10.0
libtpu: 0.0.40
codegen_flags: <defaults>
</compile_context>

<pallas_src>
import functools

import jax
import jax.numpy as jnp
from jax.experimental import pallas as pl
from jax.experimental.pallas import tpu as pltpu


def _laguerre_kan_kernel(x_ref, w_ref, o_ref, *, degree: int, alpha: float):
    # x_ref: (I, TB)            transposed input tile (batch on lanes)
    # w_ref: (O, (D+1)*I)       fused degree-major coefficients, bf16
    # o_ref: (O, TB)            transposed output tile (lane-dense store)
    x = jnp.tanh(x_ref[...].astype(jnp.float32))        # recurrence runs in f32

    polys = [jnp.ones_like(x)]                           # L_0(x) = 1
    if degree > 0:
        l_km2 = polys[0]
        l_km1 = (1.0 + alpha) - x                         # L_1(x) = 1 + alpha - x
        polys.append(l_km1)
        # L_k = ((2(k-1)+1+alpha - x) * L_{k-1} - (k-1+alpha) * L_{k-2}) / k
        for k in range(2, degree + 1):
            c1 = 2.0 * (k - 1) + 1.0 + alpha
            c2 = float(k - 1) + alpha
            inv_k = 1.0 / float(k)                        # constant mul, not a divide
            l_k = ((c1 - x) * l_km1 - c2 * l_km2) * inv_k
            polys.append(l_k)
            l_km2, l_km1 = l_km1, l_k

    # Stack the degree pieces along sublanes: each piece is (I, TB) with I a multiple
    # of 8, so this is vreg placement only (no lane rotates, no materialized temp).
    lag = jnp.concatenate(polys, axis=0).astype(w_ref.dtype)    # ((D+1)*I, TB) bf16

    # Single MXU matmul, bf16 operands, f32 accumulation; output is lane-dense in TB.
    acc = jnp.dot(w_ref[...], lag, preferred_element_type=jnp.float32)  # (O, TB) f32
    o_ref[...] = acc.astype(o_ref.dtype)


def _round_up(n: int, m: int) -> int:
    return ((n + m - 1) // m) * m


def _num_tensorcores() -> int:
    """Best-effort TensorCores per chip (v7x = 2, v5e/v6e = 1)."""
    try:
        kind = jax.devices()[0].device_kind.lower()
    except Exception:
        return 1
    return 2 if "v7" in kind else 1


def laguerre_kan_forward(x, coeffs_iod, *, degree: int, alpha: float,
                         batch_tile: int = 8192, out_dtype=None):
    """Pallas forward for LaguerreKANLayer.

    x          : any shape whose elements flatten to (-1, input_dim)
    coeffs_iod : (input_dim, output_dim, degree+1)  -- PyTorch parameter layout
    returns    : (B, output_dim) in `out_dtype`.

    Note: out_dtype defaults to x.dtype (so bf16 in -> bf16 out, halving writeback
    bytes); pass out_dtype=jnp.float32 to exactly match the PyTorch module's return
    dtype.  Accumulation is always f32, coefficients are used in bf16.
    """
    input_dim, output_dim, dp1 = coeffs_iod.shape
    assert dp1 == degree + 1
    x_flat = x.reshape(-1, input_dim)
    B = x_flat.shape[0]
    if out_dtype is None:
        out_dtype = x_flat.dtype

    # Batch maps to the 128-lane axis, so the batch tile is a multiple of 128.
    tb = max(128, min(_round_up(batch_tile, 128), _round_up(B, 128)))
    if _num_tensorcores() > 1:
        # v7x: prefer >= 8 grid steps (>= 4 per TensorCore) when that still leaves
        # tiles of >= 1024 rows; never shrink below that just to add steps.
        tb = min(tb, max(1024, _round_up(pl.cdiv(B, 8), 128)))
    grid_b = pl.cdiv(B, tb)
    b_pad = grid_b * tb

    # Layout plumbing (plain JAX, once per call):
    #   x: (B, I) -> (I, b_pad)  batch on lanes; zero-padded columns are sliced off below.
    xt = jnp.transpose(x_flat)
    if b_pad != B:
        xt = jnp.pad(xt, ((0, 0), (0, b_pad - B)))

    #   coeffs: (I, O, D+1) -> (O, D+1, I) -> (O, (D+1)*I), degree-major along K so it
    #   lines up with the in-kernel sublane stack; bf16 is the native MXU operand dtype.
    w_fused = (jnp.transpose(coeffs_iod, (1, 2, 0))
               .reshape(output_dim, dp1 * input_dim)
               .astype(jnp.bfloat16))

    kernel = functools.partial(_laguerre_kan_kernel, degree=degree, alpha=alpha)

    out_t = pl.pallas_call(
        kernel,
        out_shape=jax.ShapeDtypeStruct((output_dim, b_pad), out_dtype),
        grid_spec=pltpu.PrefetchScalarGridSpec(
            num_scalar_prefetch=0,
            grid=(grid_b,),
            in_specs=[
                pl.BlockSpec((input_dim, tb), lambda i: (0, i)),
                # Small, grid-invariant coefficient slab: resident in VMEM every step.
                pl.BlockSpec((output_dim, dp1 * input_dim), lambda i: (0, 0)),
            ],
            out_specs=pl.BlockSpec((output_dim, tb), lambda i: (0, i)),
        ),
        compiler_params=pltpu.CompilerParams(
            dimension_semantics=("parallel",)),
    )(xt, w_fused)

    # (O, b_pad) -> (B, O); consumers that can take (O, B) directly can skip this.
    return jnp.transpose(out_t[:, :B])


def _reference_forward(x, coeffs_iod, degree, alpha):
    """Pure-JAX replica of the PyTorch forward (for correctness check)."""
    input_dim = coeffs_iod.shape[0]
    x = x.reshape(-1, input_dim)
    x = jnp.tanh(x)
    polys = [jnp.ones_like(x)]
    if degree > 0:
        polys.append(1.0 + alpha - x)
    for k in range(2, degree + 1):
        term1 = (2.0 * (k - 1) + 1.0 + alpha - x) * polys[k - 1]
        term2 = (k - 1 + alpha) * polys[k - 2]
        polys.append((term1 - term2) / k)
    laguerre = jnp.stack(polys, axis=-1)  # (B, I, D+1)
    return jnp.einsum('bid,iod->bo', laguerre, coeffs_iod)


if __name__ == "__main__":
    input_dim = 16
    output_dim = 32
    degree = 4
    alpha = 0.5

    key = jax.random.PRNGKey(0)
    k_coef, k_x = jax.random.split(key)

    # nn.init.normal_(coeffs, mean=0.0, std=1/(input_dim*(degree+1)))
    std = 1.0 / (input_dim * (degree + 1))
    coeffs = std * jax.random.normal(
        k_coef, (input_dim, output_dim, degree + 1), dtype=jnp.float32)

    # Input consistent with forward's view(-1, input_dim): (2, 5, 16) -> (10, 16).
    # B=10 exercises the pad-to-128-lanes path.
    x = jax.random.normal(k_x, (2, 5, input_dim), dtype=jnp.float32)

    y = laguerre_kan_forward(x, coeffs, degree=degree, alpha=alpha)
    y = jax.block_until_ready(y)

    y_ref = _reference_forward(x, coeffs, degree, alpha)
    assert y.shape == (10, output_dim), y.shape
    # Tolerance reflects bf16 matmul operands (f32 accumulation) vs. the all-f32 reference.
    assert jnp.allclose(y, y_ref, atol=1e-2, rtol=1e-2), "mismatch vs reference"

    print("KERNEL_OK")
</pallas_src>

<mosaic_0001>
module attributes {stable_mosaic.version = 11 : i64} {
  func.func @_laguerre_kan_kernel(%arg0: i32, %arg1: memref<16x128xf32, #tpu.memory_space<vmem>>, %arg2: memref<32x80xbf16, #tpu.memory_space<vmem>>, %arg3: memref<32x128xf32, #tpu.memory_space<vmem>>) attributes {dimension_semantics = [#tpu.dimension_semantics<parallel>], iteration_bounds = array<i64: 1>, scalar_prefetch = 0 : i64, scratch_operands = 0 : i64, tpu.core_type = #tpu.core_type<tc>, window_params = [{transform_indices = @transform_0, window_bounds = array<i64: 16, 128>}, {pipeline_mode = #tpu.pipeline_mode<synchronous>, transform_indices = @transform_1, window_bounds = array<i64: 32, 80>}, {transform_indices = @transform_2, window_bounds = array<i64: 32, 128>}]} {
    %c0 = arith.constant 0 : index
    %c0_0 = arith.constant 0 : index
    %0 = vector.load %arg1[%c0, %c0_0] : memref<16x128xf32, #tpu.memory_space<vmem>>, vector<16x128xf32>
    %1 = math.tanh %0 : vector<16x128xf32>
    %cst = arith.constant 1.000000e+00 : f32
    %2 = vector.broadcast %cst : f32 to vector<16x128xf32>
    %cst_1 = arith.constant 1.500000e+00 : f32
    %3 = vector.broadcast %cst_1 : f32 to vector<16x128xf32>
    %4 = arith.subf %3, %1 : vector<16x128xf32>
    %cst_2 = arith.constant 3.500000e+00 : f32
    %5 = vector.broadcast %cst_2 : f32 to vector<16x128xf32>
    %6 = arith.subf %5, %1 : vector<16x128xf32>
    %7 = arith.mulf %6, %4 : vector<16x128xf32>
    %cst_3 = arith.constant 1.500000e+00 : f32
    %8 = vector.broadcast %cst_3 : f32 to vector<16x128xf32>
    %9 = arith.mulf %8, %2 : vector<16x128xf32>
    %10 = arith.subf %7, %9 : vector<16x128xf32>
    %cst_4 = arith.constant 5.000000e-01 : f32
    %11 = vector.broadcast %cst_4 : f32 to vector<16x128xf32>
    %12 = arith.mulf %10, %11 : vector<16x128xf32>
    %cst_5 = arith.constant 5.500000e+00 : f32
    %13 = vector.broadcast %cst_5 : f32 to vector<16x128xf32>
    %14 = arith.subf %13, %1 : vector<16x128xf32>
    %15 = arith.mulf %14, %12 : vector<16x128xf32>
    %cst_6 = arith.constant 2.500000e+00 : f32
    %16 = vector.broadcast %cst_6 : f32 to vector<16x128xf32>
    %17 = arith.mulf %16, %4 : vector<16x128xf32>
    %18 = arith.subf %15, %17 : vector<16x128xf32>
    %cst_7 = arith.constant 0.333333343 : f32
    %19 = vector.broadcast %cst_7 : f32 to vector<16x128xf32>
    %20 = arith.mulf %18, %19 : vector<16x128xf32>
    %cst_8 = arith.constant 7.500000e+00 : f32
    %21 = vector.broadcast %cst_8 : f32 to vector<16x128xf32>
    %22 = arith.subf %21, %1 : vector<16x128xf32>
    %23 = arith.mulf %22, %20 : vector<16x128xf32>
    %cst_9 = arith.constant 3.500000e+00 : f32
    %24 = vector.broadcast %cst_9 : f32 to vector<16x128xf32>
    %25 = arith.mulf %24, %12 : vector<16x128xf32>
    %26 = arith.subf %23, %25 : vector<16x128xf32>
    %cst_10 = arith.constant 2.500000e-01 : f32
    %27 = vector.broadcast %cst_10 : f32 to vector<16x128xf32>
    %28 = arith.mulf %26, %27 : vector<16x128xf32>
    %29 = tpu.concatenate %2, %4, %12, %20, %28 in 0 : vector<16x128xf32>, vector<16x128xf32>, vector<16x128xf32>, vector<16x128xf32>, vector<16x128xf32> -> vector<80x128xf32>
    %30 = arith.truncf %29 : vector<80x128xf32> to vector<80x128xbf16>
    %c0_11 = arith.constant 0 : index
    %c0_12 = arith.constant 0 : index
    %31 = vector.load %arg2[%c0_11, %c0_12] : memref<32x80xbf16, #tpu.memory_space<vmem>>, vector<32x80xbf16>
    %cst_13 = arith.constant dense<0.000000e+00> : vector<32x128xf32>
    %32 = tpu.matmul %31, %30, %cst_13 {dimension_numbers = #tpu.dot_dimension_numbers<[1], [0], [0], [1], [0, 0, 1, 1], [], []>} : vector<32x80xbf16>, vector<80x128xbf16>, vector<32x128xf32> -> vector<32x128xf32>
    %c0_14 = arith.constant 0 : index
    %c0_15 = arith.constant 0 : index
    %33 = vector.load %arg3[%c0_14, %c0_15] : memref<32x128xf32, #tpu.memory_space<vmem>>, vector<32x128xf32>
    tpu.vector_store %arg3[%c0_14, %c0_15], %32 {strides = array<i32>} : memref<32x128xf32, #tpu.memory_space<vmem>>, vector<32x128xf32>,
    return
  }
  func.func @transform_0(%arg0: i32) -> (i32, i32) {
    %c0_i32 = arith.constant 0 : i32
    %c0_i32_0 = arith.constant 0 : i32
    return %c0_i32, %arg0 : i32, i32
  }
  func.func @transform_1(%arg0: i32) -> (i32, i32) {
    %c0_i32 = arith.constant 0 : i32
    %c0_i32_0 = arith.constant 0 : i32
    %c0_i32_1 = arith.constant 0 : i32
    return %c0_i32, %c0_i32_0 : i32, i32
  }
  func.func @transform_2(%arg0: i32) -> (i32, i32) {
    %c0_i32 = arith.constant 0 : i32
    %c0_i32_0 = arith.constant 0 : i32
    return %c0_i32, %arg0 : i32, i32
  }
}

</mosaic_0001>

<llo_original>
// kernel: tpu_custom_call.1
$region0: #{tpu_custom_call.1}
  #allocation0 [shape = 'u32[]', space=smem, size = 0x4, offset = 0x4, fixed_abs, tag = 'smem constant byte address 0x4 - core index']
  #allocation1 [shape = 'u32[72,128]{1,0:T(1,128)}', space=vmem, size = 0x9000, scoped, tag = 'internal scratch']
  %s0 = inlined_call_operand.hbm [shape: f32[16,128], index: 0, kind: input, shape index: {}]
  %s1 = inlined_call_operand.hbm [shape: bf16[32,80], index: 1, kind: input, shape index: {}]
  %s2 = inlined_call_operand.hbm [shape: f32[32,128], index: 2, kind: output, shape index: {}]
  %s3 = sld [smem:[#allocation0]]
  $region26: #{tpu_custom_call.1} parent=0
    _
  %s5 = ssub.s32 1, %s3
  %s6 = scalar_select 0, %s5, %s3
  $region1: #{tpu_custom_call.1} parent=0
    #allocation2 [shape = 'u8[8192]{0}', space=vmem, size = 0x2000, scoped, tag = 'input window, operand 0, single buffered']
    #allocation3 [shape = 's32[1]{0}', space=sflag, size = 0x4, scoped, tag = 'scoped memory for tpu_custom_call.1']
    #allocation4 [shape = 's32[1]{0}', space=sflag, size = 0x4, scoped, tag = 'scoped memory for tpu_custom_call.1']
    #allocation5 [shape = 'u8[8192]{0}', space=vmem, size = 0x2000, scoped, tag = 'input window, operand 1, single buffered']
    #allocation6 [shape = 's32[1]{0}', space=sflag, size = 0x4, scoped, tag = 'scoped memory for tpu_custom_call.1']
    #allocation7 [shape = 'u8[16384]{0}', space=vmem, size = 0x4000, scoped, tag = 'output window, operand 0, single buffered']
    %7 = vsyncpa [#allocation3], 0
    %8 = vsyncpa [#allocation6], 0
    %9 = vsyncpa [#allocation4], 0
    // Predicated region
    $region2: #{tpu_custom_call.1} parent=1 // pred_check
      _
    $region3: #{tpu_custom_call.1} parent=1 // pred_check_branch
      %11 = sbr.rel (0) target = $region5
    $region4: #{tpu_custom_call.1} parent=1 // pred_region
      %13 = vsyncadd [#allocation3], 0
      %s14 = sshll.u32 %s0, 4
      %s15 = int_to_ptr.hbm [resolvable:$true] %s14
      %s16 = sshll.u32 [#allocation2], 4
      %s17 = int_to_ptr.vmem [resolvable:$true] %s16
      %22 = dma.hbm_to_vmem [thread:$0]  %s15, 256, %s17, [#allocation3], 128, 128, 8
    $region5: #{tpu_custom_call.1} parent=1 // pred_fallthru
      _
    // Predicated region
    $region6: #{tpu_custom_call.1} parent=1 // pred_check
      _
    $region7: #{tpu_custom_call.1} parent=1 // pred_check_branch
      %24 = sbr.rel (0) target = $region9
    $region8: #{tpu_custom_call.1} parent=1 // pred_region
      %26 = vsyncadd [#allocation6], 0
      %s27 = sshll.u32 %s1, 4
      %s28 = int_to_ptr.hbm [resolvable:$true] %s27
      %s29 = sshll.u32 [#allocation5], 4
      %s30 = int_to_ptr.vmem [resolvable:$true] %s29
      %35 = dma.hbm_to_vmem [thread:$0]  %s28, 256, %s30, [#allocation6], 64, 64, 4
    $region9: #{tpu_custom_call.1} parent=1 // pred_fallthru
      _
    // Predicated region
    $region10: #{tpu_custom_call.1} parent=1 // pred_check
      _
    $region11: #{tpu_custom_call.1} parent=1 // pred_check_branch
      %37 = sbr.rel (0) target = $region13
    $region12: #{tpu_custom_call.1} parent=1 // pred_region
      %39 = dma.done [#allocation3], 256
    $region13: #{tpu_custom_call.1} parent=1 // pred_fallthru
      _
    // Predicated region
    $region14: #{tpu_custom_call.1} parent=1 // pred_check
      _
    $region15: #{tpu_custom_call.1} parent=1 // pred_check_branch
      %41 = sbr.rel (0) target = $region17
    $region16: #{tpu_custom_call.1} parent=1 // pred_region
      %43 = dma.done [#allocation6], 256
    $region17: #{tpu_custom_call.1} parent=1 // pred_fallthru
      _
    %v45 = vld [vmem:[#allocation2] sm:$0xff]
    %v46 = vld [vmem:[#allocation2 + $0x8] sm:$0xff]
    %v47 = vtanh.pop %v45
    %v48 = vtanh.pop %v46
    %v49 = vsub.f32 1.5, %v47
    %v50 = vsub.f32 1.5, %v48
    %v51 = vsub.f32 3.5, %v47
    %v52 = vsub.f32 3.5, %v48
    %v53 = vmul.f32 %v51, %v49
    %v54 = vmul.f32 %v52, %v50
    %v55 = vsub.f32 %v53, 1.5
    %v56 = vsub.f32 %v54, 1.5
    %v57 = vmul.f32 %v55, 0.5
    %v58 = vmul.f32 %v56, 0.5
    %v59 = vsub.f32 5.5, %v47
    %v60 = vsub.f32 5.5, %v48
    %v61 = vmul.f32 %v59, %v57
    %v62 = vmul.f32 %v60, %v58
    %v63 = vmul.f32 %v49, 2.5
    %v64 = vmul.f32 %v50, 2.5
    %v65 = vsub.f32 %v61, %v63
    %v66 = vsub.f32 %v62, %v64
    %v67 = vmul.f32 %v65, 0.33333334
    %v68 = vmul.f32 %v66, 0.33333334
    %v69 = vsub.f32 7.5, %v47
    %v70 = vsub.f32 7.5, %v48
    %v71 = vmul.f32 %v69, %v67
    %v72 = vmul.f32 %v70, %v68
    %v73 = vmul.f32 %v57, 3.5
    %v74 = vmul.f32 %v58, 3.5
    %v75 = vsub.f32 %v71, %v73
    %v76 = vsub.f32 %v72, %v74
    %v77 = vmul.f32 %v75, 0.25
    %v78 = vmul.f32 %v76, 0.25
    %v79 = vpack.c.bf16 1.0, 1.0
    %v80 = vpack.c.bf16 %v50, %v49
    %v81 = vpack.c.bf16 %v58, %v57
    %v82 = vpack.c.bf16 %v68, %v67
    %v83 = vpack.c.bf16 %v78, %v77
    %v84 = vld [vmem:[#allocation5] sm:$0xf]
    %v85 = vld [vmem:[#allocation5 + $0x4] sm:$0xf]
    %v86 = vld [vmem:[#allocation5 + $0x8] sm:$0xf]
    %v87 = vld [vmem:[#allocation5 + $0xc] sm:$0xf]
    %v92 = vunpack.c.l.b16 %v84
    %v93 = vunpack.c.l.b16 %v85
    %v94 = vunpack.c.l.b16 %v86
    %v95 = vunpack.c.l.b16 %v87
    %v96 = vpack.c.b16 %v93, %v92
    %v97 = vpack.c.b16 %v95, %v94
    %vm98 = vcmask 654336
    %v100 = vsel %vm98, %v96, 0
    %v103 = vsel %vm98, %v97, 0
    %105 = vmatpush.bf16.msra.mxu0 0
    %106 = vmatpush.bf16.msra.mxu0 0
    %107 = vmatpush.bf16.msra.mxu0 0
    %108 = vmatpush.bf16.msra.mxu0 %v83
    %109 = vmatpush.bf16.msra.mxu0 %v82
    %110 = vmatpush.bf16.msra.mxu0 %v81
    %111 = vmatpush.bf16.msra.mxu0 %v80
    %112 = vmatpush.bf16.msra.mxu0 %v79
    %113 = vmatmul.bf16.gmra.mxu0 %v100
    %v114 = vpop.f32.mrf.mxu0
    %v115 = vadd.f32 0.0, %v114
    %v116 = vpop.f32.mrf.mxu0
    %v117 = vadd.f32 0.0, %v116
    %118 = vmatmul.bf16.gmra.mxu0 %v103
    %v119 = vpop.f32.mrf.mxu0
    %v120 = vadd.f32 0.0, %v119
    %v121 = vpop.f32.mrf.mxu0
    %v122 = vadd.f32 0.0, %v121
    %123 = vdwg.mxu0
    %124 = vst [vmem:[#allocation7] sm:$0xff] %v115
    %125 = vst [vmem:[#allocation7 + $0x8] sm:$0xff] %v117
    %126 = vst [vmem:[#allocation7 + $0x10] sm:$0xff] %v120
    %127 = vst [vmem:[#allocation7 + $0x18] sm:$0xff] %v122
    // Predicated region
    $region18: #{tpu_custom_call.1} parent=1 // pred_check
      _
    $region19: #{tpu_custom_call.1} parent=1 // pred_check_branch
      %129 = sbr.rel (0) target = $region21
    $region20: #{tpu_custom_call.1} parent=1 // pred_region
      %131 = vsyncadd [#allocation4], 0
      %s132 = sshll.u32 [#allocation7], 4
      %s133 = int_to_ptr.vmem [resolvable:$true] %s132
      %s134 = sshll.u32 %s2, 4
      %s135 = int_to_ptr.hbm [resolvable:$true] %s134
      %140 = dma.vmem_to_hbm [thread:$0]  %s133, 512, %s135, [#allocation4], 128, 128, 8
    $region21: #{tpu_custom_call.1} parent=1 // pred_fallthru
      _
    // Predicated region
    $region22: #{tpu_custom_call.1} parent=1 // pred_check
      _
    $region23: #{tpu_custom_call.1} parent=1 // pred_check_branch
      %142 = sbr.rel (0) target = $region25
    $region24: #{tpu_custom_call.1} parent=1 // pred_region
      %144 = dma.done [#allocation4], 512
    $region25: #{tpu_custom_call.1} parent=1 // pred_fallthru
      _
    %145 = vsyncpa [#allocation3], 1
    %146 = vsyncpa [#allocation6], 1
    %147 = vsyncpa [#allocation4], 1

</llo_original>
